<compile_context>
chip_gen: v7x
topology: tpu7x:2x2x1
jax: 0.10.0
libtpu: 0.0.40
codegen_flags: <defaults>
</compile_context>

<pallas_src>
import functools

import jax
import jax.numpy as jnp
from jax import lax
from jax.experimental import pallas as pl
from jax.experimental.pallas import tpu as pltpu


# 3x3 taps in (dy, dx) order: dy = row offset, dx = column offset.
_TAPS = tuple((dy, dx) for dy in (-1, 0, 1) for dx in (-1, 0, 1))
_INV_SQRT2 = 0.7071067811865476
_SUBLANE = 8  # f32 sublane tile


def _round_up(v, m):
    return (v + m - 1) // m * m


def _gelu_exact(x):
    """Exact (erf-based) GELU -- matches torch.nn.GELU() default."""
    return 0.5 * x * (1.0 + lax.erf(x * jnp.float32(_INV_SQRT2)))


def _conv3x3_gelu(x, w_ref, b_ref, masks_ref, width):
    """3x3 conv (stride 1, pad 1) + bias + exact GELU on a (C, pix) tile.

    Channels (sublane dim) are padded to a multiple of 8, so the 9 shifted taps
    concatenate into a sublane-aligned (9*C, pix) im2col buffer and the whole
    conv is ONE MXU matmul with K = 9*C.  The 1-pixel halo is handled with
    pltpu.roll (XLU) on the flat lane axis plus precomputed boundary masks that
    zero any tap reading outside its own image (this also kills cross-image and
    wrap-around contributions when several images share the lane axis).
    """
    _, pix = x.shape
    taps = []
    for t, (dy, dx) in enumerate(_TAPS):
        s = dy * width + dx                      # flat source offset
        if s == 0:
            taps.append(x)                       # centre tap: identity, all valid
        else:
            shifted = pltpu.roll(x, shift=(-s) % pix, axis=1)   # shifted[p] = x[p+s]
            taps.append(shifted * masks_ref[t])  # (1, pix) mask broadcasts over C
    # TODO(synk): on v7x (64 MiB VMEM, MRB in-place accumulation) at large pix,
    # replace the materialized im2col buffer with 9 accumulating K=C matmuls.
    patches = jnp.concatenate(taps, axis=0)      # (9*C, pix), 8-row pieces
    acc = jnp.dot(w_ref[...], patches, preferred_element_type=jnp.float32)
    return _gelu_exact(acc + b_ref[...])         # bias is (Cout, 1)


def _mlp_block_kernel(masks_ref, x_ref, w1_ref, b1_ref, w2_ref, b2_ref, o_ref,
                      *, width):
    """One batch shard: conv1+GELU -> conv2+GELU, fully resident on-chip."""
    x = x_ref[0].astype(jnp.float32)                          # (Cin_p, pix)
    h = _conv3x3_gelu(x, w1_ref, b1_ref, masks_ref, width)    # (Chid_p, pix), VMEM
    y = _conv3x3_gelu(h, w2_ref, b2_ref, masks_ref, width)    # (Cout, pix)
    o_ref[0] = y.astype(o_ref.dtype)


def _make_tap_masks(height, width, imgs_per_shard):
    """(9, 1, imgs*H*W) float masks: 1.0 where tap (dy, dx) reads inside the image."""
    p = jnp.arange(height * width, dtype=jnp.int32)
    row, col = p // width, p % width
    masks = []
    for dy, dx in _TAPS:
        ok = ((row + dy >= 0) & (row + dy < height) &
              (col + dx >= 0) & (col + dx < width))
        masks.append(ok)
    m = jnp.stack(masks).astype(jnp.float32).reshape(9, 1, height * width)
    return jnp.tile(m, (1, 1, imgs_per_shard))


def _pack_conv_weight(w, cin_pad, cout_pad):
    """PyTorch (Cout, Cin, 3, 3) -> im2col layout (Cout_pad, 9*Cin_pad).

    Column order is tap-major then input channel, matching the in-kernel
    concatenation of the 9 shifted taps.  Padded rows/columns are zero.
    """
    cout, cin, kh, kw = w.shape
    w = jnp.pad(w, ((0, cout_pad - cout), (0, cin_pad - cin), (0, 0), (0, 0)))
    return jnp.transpose(w, (0, 2, 3, 1)).reshape(cout_pad, kh * kw * cin_pad)


def _resident_spec(arr):
    """Full-array block with constant index_map: stays resident in VMEM."""
    return pl.BlockSpec(arr.shape, lambda i: (0,) * arr.ndim)


def _choose_num_shards(n, pix_per_img, per_pixel_bytes, vmem_budget):
    """Smallest divisor of n whose per-shard working set fits the VMEM budget.

    A minimum of 2 shards for even n keeps both v7x TensorCores busy via the
    "parallel" grid axis; on single-TC chips the extra ~0.35 us grid step is
    negligible next to the lane-width gain from batch folding.
    """
    min_shards = 2 if (n % 2 == 0 and n >= 2) else 1
    for s in range(min_shards, n + 1):
        if n % s:
            continue
        if (n // s) * pix_per_img * per_pixel_bytes <= vmem_budget:
            return s
    return n


def mlp_block_apply(x_nchw, params):
    """Forward pass of MLPBlock.  x_nchw: (N, Cin, H, W), PyTorch NCHW layout."""
    w1, b1, w2, b2 = params                     # PyTorch layouts: OIHW + (Cout,)
    n, cin, height, width = x_nchw.shape
    chid, cout = w1.shape[0], w2.shape[0]
    p = height * width

    cin_p = _round_up(cin, _SUBLANE)            # pad Cin -> 8 so conv1 is im2col
    chid_p = _round_up(chid, _SUBLANE)

    # Rough f32 working-set estimate per pixel (x + both im2col buffers + h +
    # out + double-buffered I/O blocks), used only to size batch shards.
    per_pixel_bytes = 4 * (cin_p + 9 * cin_p + chid_p + 9 * chid_p + cout
                           + 2 * (cin_p + cout))
    num_shards = _choose_num_shards(n, p, per_pixel_bytes, vmem_budget=20 << 20)
    imgs = n // num_shards
    shard_pix = imgs * p

    # Host-side boundary glue: pad Cin, fold imgs-per-shard into the lane axis
    # (channels stay on sublanes), pack weights/biases for im2col matmuls.
    x_pad = jnp.pad(x_nchw.reshape(n, cin, p), ((0, 0), (0, cin_p - cin), (0, 0)))
    x_shards = (x_pad.reshape(num_shards, imgs, cin_p, p)
                .transpose(0, 2, 1, 3).reshape(num_shards, cin_p, shard_pix))

    w1_k = _pack_conv_weight(w1, cin_p, chid_p)               # (Chid_p, 9*Cin_p)
    w2_k = _pack_conv_weight(w2, chid_p, cout)                # (Cout,   9*Chid_p)
    b1_k = jnp.pad(b1, (0, chid_p - chid)).reshape(chid_p, 1)
    b2_k = b2.reshape(cout, 1)
    masks = _make_tap_masks(height, width, imgs)

    total_pix = n * p
    cost = pl.CostEstimate(
        flops=2 * total_pix * 9 * (cin_p * chid_p + chid_p * cout),
        transcendentals=total_pix * (chid_p + cout),
        bytes_accessed=4 * (x_shards.size + n * cout * p + w1_k.size + w2_k.size
                            + b1_k.size + b2_k.size + masks.size),
    )

    out_flat = pl.pallas_call(
        functools.partial(_mlp_block_kernel, width=width),
        out_shape=jax.ShapeDtypeStruct((num_shards, cout, shard_pix), x_nchw.dtype),
        grid=(num_shards,),
        in_specs=[
            _resident_spec(masks),                                  # tap masks
            pl.BlockSpec((1, cin_p, shard_pix), lambda i: (i, 0, 0)),  # shard i
            _resident_spec(w1_k),                                   # conv1 weights
            _resident_spec(b1_k),                                   # conv1 bias
            _resident_spec(w2_k),                                   # conv2 weights
            _resident_spec(b2_k),                                   # conv2 bias
        ],
        out_specs=pl.BlockSpec((1, cout, shard_pix), lambda i: (i, 0, 0)),
        compiler_params=pltpu.CompilerParams(
            dimension_semantics=("parallel",)),                     # megacore on v7x
        cost_estimate=cost,
    )(masks, x_shards, w1_k, b1_k, w2_k, b2_k)

    return (out_flat.reshape(num_shards, cout, imgs, p)
            .transpose(0, 2, 1, 3).reshape(n, cout, height, width))


def init_params(key, in_channels, hidden_channels, out_channels, ksize=3):
    """Deterministic synthetic parameters in PyTorch layout (Cout, Cin, kh, kw)."""
    k1, k2, k3, k4 = jax.random.split(key, 4)
    fan1 = in_channels * ksize * ksize
    fan2 = hidden_channels * ksize * ksize
    w1 = jax.random.normal(k1, (hidden_channels, in_channels, ksize, ksize),
                           jnp.float32) / jnp.sqrt(fan1)
    b1 = jax.random.normal(k2, (hidden_channels,), jnp.float32) * 0.01
    w2 = jax.random.normal(k3, (out_channels, hidden_channels, ksize, ksize),
                           jnp.float32) / jnp.sqrt(fan2)
    b2 = jax.random.normal(k4, (out_channels,), jnp.float32) * 0.01
    return (w1, b1, w2, b2)


def _reference(x_nchw, params):
    """Pure-JAX reference (lax conv + exact GELU) for the correctness check."""
    w1, b1, w2, b2 = params

    def conv(x, w, b):
        y = lax.conv_general_dilated(
            x, w, window_strides=(1, 1), padding=((1, 1), (1, 1)),
            dimension_numbers=("NCHW", "OIHW", "NCHW"),
            precision=lax.Precision.HIGHEST)
        return y + b[None, :, None, None]

    def gelu(v):
        return 0.5 * v * (1.0 + lax.erf(v * _INV_SQRT2))

    h = gelu(conv(x_nchw, w1, b1))
    return gelu(conv(h, w2, b2))


if __name__ == "__main__":
    # Small shapes consistent with the module (in_channels=3, kernel=3, pad=1).
    N, Cin, H, W = 2, 3, 16, 16
    hidden, Cout = 8, 4

    key = jax.random.PRNGKey(0)
    kx, kp = jax.random.split(key)
    x = jax.random.normal(kx, (N, Cin, H, W), jnp.float32)
    params = init_params(kp, Cin, hidden, Cout)

    out = jax.block_until_ready(jax.jit(mlp_block_apply)(x, params))

    ref = _reference(x, params)
    assert out.shape == (N, Cout, H, W)
    max_err = float(jnp.max(jnp.abs(out - ref)))
    assert jnp.allclose(out, ref, atol=2e-3, rtol=2e-3), max_err

    print("KERNEL_OK")
</pallas_src>

<mosaic_0001>
module attributes {stable_mosaic.version = 11 : i64} {
  func.func @_mlp_block_kernel(%arg0: i32, %arg1: memref<9x1x256xf32, #tpu.memory_space<vmem>>, %arg2: memref<1x8x256xf32, #tpu.memory_space<vmem>>, %arg3: memref<8x72xf32, #tpu.memory_space<vmem>>, %arg4: memref<8x1xf32, #tpu.memory_space<vmem>>, %arg5: memref<4x72xf32, #tpu.memory_space<vmem>>, %arg6: memref<4x1xf32, #tpu.memory_space<vmem>>, %arg7: memref<1x4x256xf32, #tpu.memory_space<vmem>>) attributes {dimension_semantics = [#tpu.dimension_semantics<parallel>], iteration_bounds = array<i64: 2>, scalar_prefetch = 0 : i64, scratch_operands = 0 : i64, tpu.core_type = #tpu.core_type<tc>, window_params = [{pipeline_mode = #tpu.pipeline_mode<synchronous>, transform_indices = @transform_0, window_bounds = array<i64: 9, 1, 256>}, {transform_indices = @transform_1, window_bounds = array<i64: 1, 8, 256>}, {pipeline_mode = #tpu.pipeline_mode<synchronous>, transform_indices = @transform_2, window_bounds = array<i64: 8, 72>}, {pipeline_mode = #tpu.pipeline_mode<synchronous>, transform_indices = @transform_3, window_bounds = array<i64: 8, 1>}, {pipeline_mode = #tpu.pipeline_mode<synchronous>, transform_indices = @transform_4, window_bounds = array<i64: 4, 72>}, {pipeline_mode = #tpu.pipeline_mode<synchronous>, transform_indices = @transform_5, window_bounds = array<i64: 4, 1>}, {transform_indices = @transform_6, window_bounds = array<i64: 1, 4, 256>}]} {
    %c0 = arith.constant 0 : index
    %c0_0 = arith.constant 0 : index
    %c0_1 = arith.constant 0 : index
    %0 = vector.load %arg2[%c0, %c0_0, %c0_1] : memref<1x8x256xf32, #tpu.memory_space<vmem>>, vector<1x8x256xf32>
    %1 = vector.shape_cast %0 : vector<1x8x256xf32> to vector<8x256xf32>
    %c17_i32 = arith.constant 17 : i32
    %2 = tpu.dynamic_rotate %1 by %c17_i32 dim 1 : vector<8x256xf32>, i32 -> vector<8x256xf32>
    %c0_2 = arith.constant 0 : index
    %c0_3 = arith.constant 0 : index
    %c0_4 = arith.constant 0 : index
    %3 = vector.load %arg1[%c0_2, %c0_3, %c0_4] : memref<9x1x256xf32, #tpu.memory_space<vmem>>, vector<1x1x256xf32>
    %4 = vector.shape_cast %3 : vector<1x1x256xf32> to vector<1x256xf32>
    %5 = vector.broadcast %4 : vector<1x256xf32> to vector<8x256xf32>
    %6 = arith.mulf %2, %5 : vector<8x256xf32>
    %c16_i32 = arith.constant 16 : i32
    %7 = tpu.dynamic_rotate %1 by %c16_i32 dim 1 : vector<8x256xf32>, i32 -> vector<8x256xf32>
    %c1 = arith.constant 1 : index
    %c0_5 = arith.constant 0 : index
    %c0_6 = arith.constant 0 : index
    %8 = vector.load %arg1[%c1, %c0_5, %c0_6] : memref<9x1x256xf32, #tpu.memory_space<vmem>>, vector<1x1x256xf32>
    %9 = vector.shape_cast %8 : vector<1x1x256xf32> to vector<1x256xf32>
    %10 = vector.broadcast %9 : vector<1x256xf32> to vector<8x256xf32>
    %11 = arith.mulf %7, %10 : vector<8x256xf32>
    %c15_i32 = arith.constant 15 : i32
    %12 = tpu.dynamic_rotate %1 by %c15_i32 dim 1 : vector<8x256xf32>, i32 -> vector<8x256xf32>
    %c2 = arith.constant 2 : index
    %c0_7 = arith.constant 0 : index
    %c0_8 = arith.constant 0 : index
    %13 = vector.load %arg1[%c2, %c0_7, %c0_8] : memref<9x1x256xf32, #tpu.memory_space<vmem>>, vector<1x1x256xf32>
    %14 = vector.shape_cast %13 : vector<1x1x256xf32> to vector<1x256xf32>
    %15 = vector.broadcast %14 : vector<1x256xf32> to vector<8x256xf32>
    %16 = arith.mulf %12, %15 : vector<8x256xf32>
    %c1_i32 = arith.constant 1 : i32
    %17 = tpu.dynamic_rotate %1 by %c1_i32 dim 1 : vector<8x256xf32>, i32 -> vector<8x256xf32>
    %c3 = arith.constant 3 : index
    %c0_9 = arith.constant 0 : index
    %c0_10 = arith.constant 0 : index
    %18 = vector.load %arg1[%c3, %c0_9, %c0_10] : memref<9x1x256xf32, #tpu.memory_space<vmem>>, vector<1x1x256xf32>
    %19 = vector.shape_cast %18 : vector<1x1x256xf32> to vector<1x256xf32>
    %20 = vector.broadcast %19 : vector<1x256xf32> to vector<8x256xf32>
    %21 = arith.mulf %17, %20 : vector<8x256xf32>
    %c255_i32 = arith.constant 255 : i32
    %22 = tpu.dynamic_rotate %1 by %c255_i32 dim 1 : vector<8x256xf32>, i32 -> vector<8x256xf32>
    %c5 = arith.constant 5 : index
    %c0_11 = arith.constant 0 : index
    %c0_12 = arith.constant 0 : index
    %23 = vector.load %arg1[%c5, %c0_11, %c0_12] : memref<9x1x256xf32, #tpu.memory_space<vmem>>, vector<1x1x256xf32>
    %24 = vector.shape_cast %23 : vector<1x1x256xf32> to vector<1x256xf32>
    %25 = vector.broadcast %24 : vector<1x256xf32> to vector<8x256xf32>
    %26 = arith.mulf %22, %25 : vector<8x256xf32>
    %c241_i32 = arith.constant 241 : i32
    %27 = tpu.dynamic_rotate %1 by %c241_i32 dim 1 : vector<8x256xf32>, i32 -> vector<8x256xf32>
    %c6 = arith.constant 6 : index
    %c0_13 = arith.constant 0 : index
    %c0_14 = arith.constant 0 : index
    %28 = vector.load %arg1[%c6, %c0_13, %c0_14] : memref<9x1x256xf32, #tpu.memory_space<vmem>>, vector<1x1x256xf32>
    %29 = vector.shape_cast %28 : vector<1x1x256xf32> to vector<1x256xf32>
    %30 = vector.broadcast %29 : vector<1x256xf32> to vector<8x256xf32>
    %31 = arith.mulf %27, %30 : vector<8x256xf32>
    %c240_i32 = arith.constant 240 : i32
    %32 = tpu.dynamic_rotate %1 by %c240_i32 dim 1 : vector<8x256xf32>, i32 -> vector<8x256xf32>
    %c7 = arith.constant 7 : index
    %c0_15 = arith.constant 0 : index
    %c0_16 = arith.constant 0 : index
    %33 = vector.load %arg1[%c7, %c0_15, %c0_16] : memref<9x1x256xf32, #tpu.memory_space<vmem>>, vector<1x1x256xf32>
    %34 = vector.shape_cast %33 : vector<1x1x256xf32> to vector<1x256xf32>
    %35 = vector.broadcast %34 : vector<1x256xf32> to vector<8x256xf32>
    %36 = arith.mulf %32, %35 : vector<8x256xf32>
    %c239_i32 = arith.constant 239 : i32
    %37 = tpu.dynamic_rotate %1 by %c239_i32 dim 1 : vector<8x256xf32>, i32 -> vector<8x256xf32>
    %c8 = arith.constant 8 : index
    %c0_17 = arith.constant 0 : index
    %c0_18 = arith.constant 0 : index
    %38 = vector.load %arg1[%c8, %c0_17, %c0_18] : memref<9x1x256xf32, #tpu.memory_space<vmem>>, vector<1x1x256xf32>
    %39 = vector.shape_cast %38 : vector<1x1x256xf32> to vector<1x256xf32>
    %40 = vector.broadcast %39 : vector<1x256xf32> to vector<8x256xf32>
    %41 = arith.mulf %37, %40 : vector<8x256xf32>
    %42 = tpu.concatenate %6, %11, %16, %21, %1, %26, %31, %36, %41 in 0 : vector<8x256xf32>, vector<8x256xf32>, vector<8x256xf32>, vector<8x256xf32>, vector<8x256xf32>, vector<8x256xf32>, vector<8x256xf32>, vector<8x256xf32>, vector<8x256xf32> -> vector<72x256xf32>
    %c0_19 = arith.constant 0 : index
    %c0_20 = arith.constant 0 : index
    %43 = vector.load %arg3[%c0_19, %c0_20] : memref<8x72xf32, #tpu.memory_space<vmem>>, vector<8x72xf32>
    %cst = arith.constant dense<0.000000e+00> : vector<8x256xf32>
    %44 = tpu.matmul %43, %42, %cst {dimension_numbers = #tpu.dot_dimension_numbers<[1], [0], [0], [1], [0, 0, 1, 1], [], []>} : vector<8x72xf32>, vector<72x256xf32>, vector<8x256xf32> -> vector<8x256xf32>
    %c0_21 = arith.constant 0 : index
    %c0_22 = arith.constant 0 : index
    %45 = vector.load %arg4[%c0_21, %c0_22] : memref<8x1xf32, #tpu.memory_space<vmem>>, vector<8x1xf32>
    %46 = vector.broadcast %45 : vector<8x1xf32> to vector<8x256xf32>
    %47 = arith.addf %44, %46 : vector<8x256xf32>
    %cst_23 = arith.constant 5.000000e-01 : f32
    %48 = vector.broadcast %cst_23 : f32 to vector<8x256xf32>
    %49 = arith.mulf %48, %47 : vector<8x256xf32>
    %cst_24 = arith.constant 0.707106769 : f32
    %50 = vector.broadcast %cst_24 : f32 to vector<8x256xf32>
    %51 = arith.mulf %47, %50 : vector<8x256xf32>
    %52 = math.erf %51 : vector<8x256xf32>
    %cst_25 = arith.constant 1.000000e+00 : f32
    %53 = vector.broadcast %cst_25 : f32 to vector<8x256xf32>
    %54 = arith.addf %53, %52 : vector<8x256xf32>
    %55 = arith.mulf %49, %54 : vector<8x256xf32>
    %c17_i32_26 = arith.constant 17 : i32
    %56 = tpu.dynamic_rotate %55 by %c17_i32_26 dim 1 : vector<8x256xf32>, i32 -> vector<8x256xf32>
    %c0_27 = arith.constant 0 : index
    %c0_28 = arith.constant 0 : index
    %c0_29 = arith.constant 0 : index
    %57 = vector.load %arg1[%c0_27, %c0_28, %c0_29] : memref<9x1x256xf32, #tpu.memory_space<vmem>>, vector<1x1x256xf32>
    %58 = vector.shape_cast %57 : vector<1x1x256xf32> to vector<1x256xf32>
    %59 = vector.broadcast %58 : vector<1x256xf32> to vector<8x256xf32>
    %60 = arith.mulf %56, %59 : vector<8x256xf32>
    %c16_i32_30 = arith.constant 16 : i32
    %61 = tpu.dynamic_rotate %55 by %c16_i32_30 dim 1 : vector<8x256xf32>, i32 -> vector<8x256xf32>
    %c1_31 = arith.constant 1 : index
    %c0_32 = arith.constant 0 : index
    %c0_33 = arith.constant 0 : index
    %62 = vector.load %arg1[%c1_31, %c0_32, %c0_33] : memref<9x1x256xf32, #tpu.memory_space<vmem>>, vector<1x1x256xf32>
    %63 = vector.shape_cast %62 : vector<1x1x256xf32> to vector<1x256xf32>
    %64 = vector.broadcast %63 : vector<1x256xf32> to vector<8x256xf32>
    %65 = arith.mulf %61, %64 : vector<8x256xf32>
    %c15_i32_34 = arith.constant 15 : i32
    %66 = tpu.dynamic_rotate %55 by %c15_i32_34 dim 1 : vector<8x256xf32>, i32 -> vector<8x256xf32>
    %c2_35 = arith.constant 2 : index
    %c0_36 = arith.constant 0 : index
    %c0_37 = arith.constant 0 : index
    %67 = vector.load %arg1[%c2_35, %c0_36, %c0_37] : memref<9x1x256xf32, #tpu.memory_space<vmem>>, vector<1x1x256xf32>
    %68 = vector.shape_cast %67 : vector<1x1x256xf32> to vector<1x256xf32>
    %69 = vector.broadcast %68 : vector<1x256xf32> to vector<8x256xf32>
    %70 = arith.mulf %66, %69 : vector<8x256xf32>
    %c1_i32_38 = arith.constant 1 : i32
    %71 = tpu.dynamic_rotate %55 by %c1_i32_38 dim 1 : vector<8x256xf32>, i32 -> vector<8x256xf32>
    %c3_39 = arith.constant 3 : index
    %c0_40 = arith.constant 0 : index
    %c0_41 = arith.constant 0 : index
    %72 = vector.load %arg1[%c3_39, %c0_40, %c0_41] : memref<9x1x256xf32, #tpu.memory_space<vmem>>, vector<1x1x256xf32>
    %73 = vector.shape_cast %72 : vector<1x1x256xf32> to vector<1x256xf32>
    %74 = vector.broadcast %73 : vector<1x256xf32> to vector<8x256xf32>
    %75 = arith.mulf %71, %74 : vector<8x256xf32>
    %c255_i32_42 = arith.constant 255 : i32
    %76 = tpu.dynamic_rotate %55 by %c255_i32_42 dim 1 : vector<8x256xf32>, i32 -> vector<8x256xf32>
    %c5_43 = arith.constant 5 : index
    %c0_44 = arith.constant 0 : index
    %c0_45 = arith.constant 0 : index
    %77 = vector.load %arg1[%c5_43, %c0_44, %c0_45] : memref<9x1x256xf32, #tpu.memory_space<vmem>>, vector<1x1x256xf32>
    %78 = vector.shape_cast %77 : vector<1x1x256xf32> to vector<1x256xf32>
    %79 = vector.broadcast %78 : vector<1x256xf32> to vector<8x256xf32>
    %80 = arith.mulf %76, %79 : vector<8x256xf32>
    %c241_i32_46 = arith.constant 241 : i32
    %81 = tpu.dynamic_rotate %55 by %c241_i32_46 dim 1 : vector<8x256xf32>, i32 -> vector<8x256xf32>
    %c6_47 = arith.constant 6 : index
    %c0_48 = arith.constant 0 : index
    %c0_49 = arith.constant 0 : index
    %82 = vector.load %arg1[%c6_47, %c0_48, %c0_49] : memref<9x1x256xf32, #tpu.memory_space<vmem>>, vector<1x1x256xf32>
    %83 = vector.shape_cast %82 : vector<1x1x256xf32> to vector<1x256xf32>
    %84 = vector.broadcast %83 : vector<1x256xf32> to vector<8x256xf32>
    %85 = arith.mulf %81, %84 : vector<8x256xf32>
    %c240_i32_50 = arith.constant 240 : i32
    %86 = tpu.dynamic_rotate %55 by %c240_i32_50 dim 1 : vector<8x256xf32>, i32 -> vector<8x256xf32>
    %c7_51 = arith.constant 7 : index
    %c0_52 = arith.constant 0 : index
    %c0_53 = arith.constant 0 : index
    %87 = vector.load %arg1[%c7_51, %c0_52, %c0_53] : memref<9x1x256xf32, #tpu.memory_space<vmem>>, vector<1x1x256xf32>
    %88 = vector.shape_cast %87 : vector<1x1x256xf32> to vector<1x256xf32>
    %89 = vector.broadcast %88 : vector<1x256xf32> to vector<8x256xf32>
    %90 = arith.mulf %86, %89 : vector<8x256xf32>
    %c239_i32_54 = arith.constant 239 : i32
    %91 = tpu.dynamic_rotate %55 by %c239_i32_54 dim 1 : vector<8x256xf32>, i32 -> vector<8x256xf32>
    %c8_55 = arith.constant 8 : index
    %c0_56 = arith.constant 0 : index
    %c0_57 = arith.constant 0 : index
    %92 = vector.load %arg1[%c8_55, %c0_56, %c0_57] : memref<9x1x256xf32, #tpu.memory_space<vmem>>, vector<1x1x256xf32>
    %93 = vector.shape_cast %92 : vector<1x1x256xf32> to vector<1x256xf32>
    %94 = vector.broadcast %93 : vector<1x256xf32> to vector<8x256xf32>
    %95 = arith.mulf %91, %94 : vector<8x256xf32>
    %96 = tpu.concatenate %60, %65, %70, %75, %55, %80, %85, %90, %95 in 0 : vector<8x256xf32>, vector<8x256xf32>, vector<8x256xf32>, vector<8x256xf32>, vector<8x256xf32>, vector<8x256xf32>, vector<8x256xf32>, vector<8x256xf32>, vector<8x256xf32> -> vector<72x256xf32>
    %c0_58 = arith.constant 0 : index
    %c0_59 = arith.constant 0 : index
    %97 = vector.load %arg5[%c0_58, %c0_59] : memref<4x72xf32, #tpu.memory_space<vmem>>, vector<4x72xf32>
    %cst_60 = arith.constant dense<0.000000e+00> : vector<4x256xf32>
    %98 = tpu.matmul %97, %96, %cst_60 {dimension_numbers = #tpu.dot_dimension_numbers<[1], [0], [0], [1], [0, 0, 1, 1], [], []>} : vector<4x72xf32>, vector<72x256xf32>, vector<4x256xf32> -> vector<4x256xf32>
    %c0_61 = arith.constant 0 : index
    %c0_62 = arith.constant 0 : index
    %99 = vector.load %arg6[%c0_61, %c0_62] : memref<4x1xf32, #tpu.memory_space<vmem>>, vector<4x1xf32>
    %100 = vector.broadcast %99 : vector<4x1xf32> to vector<4x256xf32>
    %101 = arith.addf %98, %100 : vector<4x256xf32>
    %cst_63 = arith.constant 5.000000e-01 : f32
    %102 = vector.broadcast %cst_63 : f32 to vector<4x256xf32>
    %103 = arith.mulf %102, %101 : vector<4x256xf32>
    %cst_64 = arith.constant 0.707106769 : f32
    %104 = vector.broadcast %cst_64 : f32 to vector<4x256xf32>
    %105 = arith.mulf %101, %104 : vector<4x256xf32>
    %106 = math.erf %105 : vector<4x256xf32>
    %cst_65 = arith.constant 1.000000e+00 : f32
    %107 = vector.broadcast %cst_65 : f32 to vector<4x256xf32>
    %108 = arith.addf %107, %106 : vector<4x256xf32>
    %109 = arith.mulf %103, %108 : vector<4x256xf32>
    %c0_66 = arith.constant 0 : index
    %c0_67 = arith.constant 0 : index
    %c0_68 = arith.constant 0 : index
    %110 = vector.load %arg7[%c0_66, %c0_67, %c0_68] : memref<1x4x256xf32, #tpu.memory_space<vmem>>, vector<1x4x256xf32>
    %111 = vector.shape_cast %110 : vector<1x4x256xf32> to vector<4x256xf32>
    %112 = vector.shape_cast %109 : vector<4x256xf32> to vector<1x4x256xf32>
    tpu.vector_store %arg7[%c0_66, %c0_67, %c0_68], %112 {strides = array<i32>} : memref<1x4x256xf32, #tpu.memory_space<vmem>>, vector<1x4x256xf32>,
    return
  }
  func.func @transform_0(%arg0: i32) -> (i32, i32, i32) {
    %c0_i32 = arith.constant 0 : i32
    %c0_i32_0 = arith.constant 0 : i32
    %c0_i32_1 = arith.constant 0 : i32
    %c0_i32_2 = arith.constant 0 : i32
    return %c0_i32, %c0_i32_0, %c0_i32_1 : i32, i32, i32
  }
  func.func @transform_1(%arg0: i32) -> (i32, i32, i32) {
    %c0_i32 = arith.constant 0 : i32
    %c0_i32_0 = arith.constant 0 : i32
    %c0_i32_1 = arith.constant 0 : i32
    return %arg0, %c0_i32, %c0_i32_0 : i32, i32, i32
  }
  func.func @transform_2(%arg0: i32) -> (i32, i32) {
    %c0_i32 = arith.constant 0 : i32
    %c0_i32_0 = arith.constant 0 : i32
    %c0_i32_1 = arith.constant 0 : i32
    return %c0_i32, %c0_i32_0 : i32, i32
  }
  func.func @transform_3(%arg0: i32) -> (i32, i32) {
    %c0_i32 = arith.constant 0 : i32
    %c0_i32_0 = arith.constant 0 : i32
    %c0_i32_1 = arith.constant 0 : i32
    return %c0_i32, %c0_i32_0 : i32, i32
  }
  func.func @transform_4(%arg0: i32) -> (i32, i32) {
    %c0_i32 = arith.constant 0 : i32
    %c0_i32_0 = arith.constant 0 : i32
    %c0_i32_1 = arith.constant 0 : i32
    return %c0_i32, %c0_i32_0 : i32, i32
  }
  func.func @transform_5(%arg0: i32) -> (i32, i32) {
    %c0_i32 = arith.constant 0 : i32
    %c0_i32_0 = arith.constant 0 : i32
    %c0_i32_1 = arith.constant 0 : i32
    return %c0_i32, %c0_i32_0 : i32, i32
  }
  func.func @transform_6(%arg0: i32) -> (i32, i32, i32) {
    %c0_i32 = arith.constant 0 : i32
    %c0_i32_0 = arith.constant 0 : i32
    %c0_i32_1 = arith.constant 0 : i32
    return %arg0, %c0_i32, %c0_i32_0 : i32, i32, i32
  }
}

</mosaic_0001>

<llo_original>
// kernel: mlp_block_apply.1
$region0: #{mlp_block_apply.1}
  #allocation0 [shape = 'u32[]', space=smem, size = 0x4, offset = 0x4, fixed_abs, tag = 'smem constant byte address 0x4 - core index']
  #allocation1 [shape = 'u32[144,128]{1,0:T(1,128)}', space=vmem, size = 0x12000, scoped, tag = 'internal scratch']
  %s0 = inlined_call_operand.vmem [shape: f32[9,1,256], index: 0, kind: input, shape index: {}]
  %s1 = inlined_call_operand.vmem [shape: f32[2,8,256], index: 1, kind: input, shape index: {}]
  %s2 = inlined_call_operand.vmem [shape: f32[8,72], index: 2, kind: input, shape index: {}]
  %s3 = inlined_call_operand.vmem [shape: f32[8,1], index: 3, kind: input, shape index: {}]
  %s4 = inlined_call_operand.vmem [shape: f32[4,72], index: 4, kind: input, shape index: {}]
  %s5 = inlined_call_operand.vmem [shape: f32[4,1], index: 5, kind: input, shape index: {}]
  %s6 = inlined_call_operand.vmem [shape: f32[2,4,256], index: 6, kind: output, shape index: {}]
  %s7 = sld [smem:[#allocation0]]
  $region57: #{mlp_block_apply.1} parent=0
    _
  %s9 = ssub.s32 1, %s7
  %s10 = scalar_select 0, %s9, %s7
  loop: start=0, step=1, limit=4
  $region2: #{mlp_block_apply.1} parent=0 // loop_pre_header
    _
  $region3: #{mlp_block_apply.1} parent=0 // loop_header
    %s12 = sphi 0, %s16
    %p13 = scmp.ge.s32.totalorder %s12, 4
    %s20 = sphi 0, %s20
    %s22 = sphi 0, %s20
    %s23 = sphi 0, %s22
    %s37 = sphi 0, %s23
    %s43 = sphi 0, %s45
    %s46 = sphi 0, %s43
    %s47 = sphi 0, %s46
    %s63 = sphi 0, %s47
    %s67 = sphi 0, %s67
    %s69 = sphi 0, %s67
    %s70 = sphi 0, %s69
    %s84 = sphi 0, %s70
    %s88 = sphi 0, %s88
    %s90 = sphi 0, %s88
    %s91 = sphi 0, %s90
    %s105 = sphi 0, %s91
    %s109 = sphi 0, %s109
    %s111 = sphi 0, %s109
    %s112 = sphi 0, %s111
    %s126 = sphi 0, %s112
    %s130 = sphi 0, %s130
    %s132 = sphi 0, %s130
    %s133 = sphi 0, %s132
    %s147 = sphi 0, %s133
    %s153 = sphi 0, %s155
    %s156 = sphi 0, %s153
    %s157 = sphi 0, %s156
    %s173 = sphi 0, %s157
  $region4: #{mlp_block_apply.1} parent=0 // loop_header_branch
    %15 = sbr.rel (%p13) target = $region8
  $region5: #{mlp_block_apply.1} parent=0 // loop_body
    %s17 = ssub.s32 %s12, 1
    %s18 = ssub.s32 %s12, 2
    %s19 = sadd.s32 %s12, 1
    %s21 = sadd.s32 %s20, 1
    %p24 = scmp.eq.s32.totalorder %s12, 1
    %p25 = scmp.ne.s32.totalorder %s20, %s22
    %p26 = scmp.eq.s32.totalorder %s12, 0
    %p27 = por %p25, %p26
    %p28 = scmp.ne.s32.totalorder %s20, %s22
    %p29 = scmp.eq.s32.totalorder %s17, 1
    %p30 = por %p28, %p29
    %p31 = scmp.ne.s32.totalorder %s22, %s23
    %p32 = scmp.eq.s32.totalorder %s17, 0
    %p33 = por %p31, %p32
    %p34 = scmp.ne.s32.totalorder %s22, %s23
    %p35 = scmp.eq.s32.totalorder %s18, 1
    %p36 = por %p34, %p35
    %p38 = scmp.ne.s32.totalorder %s23, %s37
    %p39 = scmp.eq.s32.totalorder %s18, 0
    %p40 = por %p38, %p39
    %s41 = ssub.s32 %s12, %s19
    %p42 = scmp.eq.s32.totalorder %s41, 0
    %s44 = sadd.s32 %s43, 1
    %s45 = scalar_select %p42, %s43, %s44
    %p48 = pneg %p42
    %p49 = scmp.eq.s32.totalorder %s12, 1
    %p50 = por %p48, %p49
    %p51 = scmp.ne.s32.totalorder %s43, %s46
    %p52 = scmp.eq.s32.totalorder %s12, 0
    %p53 = por %p51, %p52
    %p54 = scmp.ne.s32.totalorder %s43, %s46
    %p55 = scmp.eq.s32.totalorder %s17, 1
    %p56 = por %p54, %p55
    %p57 = scmp.ne.s32.totalorder %s46, %s47
    %p58 = scmp.eq.s32.totalorder %s17, 0
    %p59 = por %p57, %p58
    %p60 = scmp.ne.s32.totalorder %s46, %s47
    %p61 = scmp.eq.s32.totalorder %s18, 1
    %p62 = por %p60, %p61
    %p64 = scmp.ne.s32.totalorder %s47, %s63
    %p65 = scmp.eq.s32.totalorder %s18, 0
    %p66 = por %p64, %p65
    %s68 = sadd.s32 %s67, 1
    %p71 = scmp.eq.s32.totalorder %s12, 1
    %p72 = scmp.ne.s32.totalorder %s67, %s69
    %p73 = scmp.eq.s32.totalorder %s12, 0
    %p74 = por %p72, %p73
    %p75 = scmp.ne.s32.totalorder %s67, %s69
    %p76 = scmp.eq.s32.totalorder %s17, 1
    %p77 = por %p75, %p76
    %p78 = scmp.ne.s32.totalorder %s69, %s70
    %p79 = scmp.eq.s32.totalorder %s17, 0
    %p80 = por %p78, %p79
    %p81 = scmp.ne.s32.totalorder %s69, %s70
    %p82 = scmp.eq.s32.totalorder %s18, 1
    %p83 = por %p81, %p82
    %p85 = scmp.ne.s32.totalorder %s70, %s84
    %p86 = scmp.eq.s32.totalorder %s18, 0
    %p87 = por %p85, %p86
    %s89 = sadd.s32 %s88, 1
    %p92 = scmp.eq.s32.totalorder %s12, 1
    %p93 = scmp.ne.s32.totalorder %s88, %s90
    %p94 = scmp.eq.s32.totalorder %s12, 0
    %p95 = por %p93, %p94
    %p96 = scmp.ne.s32.totalorder %s88, %s90
    %p97 = scmp.eq.s32.totalorder %s17, 1
    %p98 = por %p96, %p97
    %p99 = scmp.ne.s32.totalorder %s90, %s91
    %p100 = scmp.eq.s32.totalorder %s17, 0
    %p101 = por %p99, %p100
    %p102 = scmp.ne.s32.totalorder %s90, %s91
    %p103 = scmp.eq.s32.totalorder %s18, 1
    %p104 = por %p102, %p103
    %p106 = scmp.ne.s32.totalorder %s91, %s105
    %p107 = scmp.eq.s32.totalorder %s18, 0
    %p108 = por %p106, %p107
    %s110 = sadd.s32 %s109, 1
    %p113 = scmp.eq.s32.totalorder %s12, 1
    %p114 = scmp.ne.s32.totalorder %s109, %s111
    %p115 = scmp.eq.s32.totalorder %s12, 0
    %p116 = por %p114, %p115
    %p117 = scmp.ne.s32.totalorder %s109, %s111
    %p118 = scmp.eq.s32.totalorder %s17, 1
    %p119 = por %p117, %p118
    %p120 = scmp.ne.s32.totalorder %s111, %s112
    %p121 = scmp.eq.s32.totalorder %s17, 0
    %p122 = por %p120, %p121
    %p123 = scmp.ne.s32.totalorder %s111, %s112
    %p124 = scmp.eq.s32.totalorder %s18, 1
    %p125 = por %p123, %p124
    %p127 = scmp.ne.s32.totalorder %s112, %s126
    %p128 = scmp.eq.s32.totalorder %s18, 0
    %p129 = por %p127, %p128
    %s131 = sadd.s32 %s130, 1
    %p134 = scmp.eq.s32.totalorder %s12, 1
    %p135 = scmp.ne.s32.totalorder %s130, %s132
    %p136 = scmp.eq.s32.totalorder %s12, 0
    %p137 = por %p135, %p136
    %p138 = scmp.ne.s32.totalorder %s130, %s132
    %p139 = scmp.eq.s32.totalorder %s17, 1
    %p140 = por %p138, %p139
    %p141 = scmp.ne.s32.totalorder %s132, %s133
    %p142 = scmp.eq.s32.totalorder %s17, 0
    %p143 = por %p141, %p142
    %p144 = scmp.ne.s32.totalorder %s132, %s133
    %p145 = scmp.eq.s32.totalorder %s18, 1
    %p146 = por %p144, %p145
    %p148 = scmp.ne.s32.totalorder %s133, %s147
    %p149 = scmp.eq.s32.totalorder %s18, 0
    %p150 = por %p148, %p149
    %s151 = ssub.s32 %s12, %s19
    %p152 = scmp.eq.s32.totalorder %s151, 0
    %s154 = sadd.s32 %s153, 1
    %s155 = scalar_select %p152, %s153, %s154
    %p158 = pneg %p152
    %p159 = scmp.eq.s32.totalorder %s12, 1
    %p160 = por %p158, %p159
    %p161 = scmp.ne.s32.totalorder %s153, %s156
    %p162 = scmp.eq.s32.totalorder %s12, 0
    %p163 = por %p161, %p162
    %p164 = scmp.ne.s32.totalorder %s153, %s156
    %p165 = scmp.eq.s32.totalorder %s17, 1
    %p166 = por %p164, %p165
    %p167 = scmp.ne.s32.totalorder %s156, %s157
    %p168 = scmp.eq.s32.totalorder %s17, 0
    %p169 = por %p167, %p168
    %p170 = scmp.ne.s32.totalorder %s156, %s157
    %p171 = scmp.eq.s32.totalorder %s18, 1
    %p172 = por %p170, %p171
    %p174 = scmp.ne.s32.totalorder %s157, %s173
    %p175 = scmp.eq.s32.totalorder %s18, 0
    %p176 = por %p174, %p175
    %p177 = scmp.le.s32.totalorder 1, %s12
    %p178 = scmp.lt.s32.totalorder %s12, 3
    %p179 = pnand %p177, %p178
    %p180 = pneg %p179
    // Predicated region
    $region9: #{mlp_block_apply.1} parent=5 // pred_check
      _
    $region10: #{mlp_block_apply.1} parent=5 // pred_check_branch
      %182 = sbr.rel (%p179) target = $region12
    $region11: #{mlp_block_apply.1} parent=5 // pred_region
      %s183 = ssub.s32 %s12, 1
      // Predicated region
      $region13: #{mlp_block_apply.1} parent=11 // pred_check
        %p184 = pneg %p33
      $region14: #{mlp_block_apply.1} parent=11 // pred_check_branch
        %186 = sbr.rel (%p184) target = $region16
      $region15: #{mlp_block_apply.1} parent=11 // pred_region
        _
      $region16: #{mlp_block_apply.1} parent=11 // pred_fallthru
        _
      // Predicated region
      $region17: #{mlp_block_apply.1} parent=11 // pred_check
        %p187 = pneg %p80
      $region18: #{mlp_block_apply.1} parent=11 // pred_check_branch
        %189 = sbr.rel (%p187) target = $region20
      $region19: #{mlp_block_apply.1} parent=11 // pred_region
        _
      $region20: #{mlp_block_apply.1} parent=11 // pred_fallthru
        _
      // Predicated region
      $region21: #{mlp_block_apply.1} parent=11 // pred_check
        %p190 = pneg %p101
      $region22: #{mlp_block_apply.1} parent=11 // pred_check_branch
        %192 = sbr.rel (%p190) target = $region24
      $region23: #{mlp_block_apply.1} parent=11 // pred_region
        _
      $region24: #{mlp_block_apply.1} parent=11 // pred_fallthru
        _
      // Predicated region
      $region25: #{mlp_block_apply.1} parent=11 // pred_check
        %p193 = pneg %p122
      $region26: #{mlp_block_apply.1} parent=11 // pred_check_branch
        %195 = sbr.rel (%p193) target = $region28
      $region27: #{mlp_block_apply.1} parent=11 // pred_region
        _
      $region28: #{mlp_block_apply.1} parent=11 // pred_fallthru
        _
      // Predicated region
      $region29: #{mlp_block_apply.1} parent=11 // pred_check
        %p196 = pneg %p143
      $region30: #{mlp_block_apply.1} parent=11 // pred_check_branch
        %198 = sbr.rel (%p196) target = $region32
      $region31: #{mlp_block_apply.1} parent=11 // pred_region
        _
      $region32: #{mlp_block_apply.1} parent=11 // pred_fallthru
        _
    $region12: #{mlp_block_apply.1} parent=5 // pred_fallthru
      _
    %p199 = scmp.lt.s32.totalorder %s12, 2
    // Predicated region
    $region33: #{mlp_block_apply.1} parent=5 // pred_check
      %p200 = pneg %p199
    $region34: #{mlp_block_apply.1} parent=5 // pred_check_branch
      %202 = sbr.rel (%p200) target = $region36
    $region35: #{mlp_block_apply.1} parent=5 // pred_region
      // Predicated region
      $region37: #{mlp_block_apply.1} parent=35 // pred_check
        %p203 = pneg %p53
      $region38: #{mlp_block_apply.1} parent=35 // pred_check_branch
        %205 = sbr.rel (%p203) target = $region40
      $region39: #{mlp_block_apply.1} parent=35 // pred_region
        %p206 = scmp.lt.s32.totalorder %s12, 1
        %s207 = scalar_select %p206, %s12, 1
        %s208 = smul.addr %s207, 2
        %s209 = smul.addr %s208, 8
        %s210 = scalar_lea.vmem %s1, %s209
      $region40: #{mlp_block_apply.1} parent=35 // pred_fallthru
        _
    $region36: #{mlp_block_apply.1} parent=5 // pred_fallthru
      _
    %p211 = scmp.le.s32.totalorder 1, %s12
    %p212 = scmp.lt.s32.totalorder %s12, 3
    %p213 = pnand %p211, %p212
    %p214 = pneg %p213
    // Predicated region
    $region41: #{mlp_block_apply.1} parent=5 // pred_check
      _
    $region42: #{mlp_block_apply.1} parent=5 // pred_check_branch
      %216 = sbr.rel (%p213) target = $region44
    $region43: #{mlp_block_apply.1} parent=5 // pred_region
      %s217 = ssub.s32 %s12, 1
      %p218 = pneg %p33
      %p219 = pneg %p30
      %p220 = scmp.lt.s32.totalorder %s17, 1
      %s221 = scalar_select %p220, %s17, 1
      %s222 = smul.addr %s221, 2
      %s223 = smul.addr %s222, 8
      %s224 = scalar_lea.vmem %s1, %s223
      %p225 = pneg %p59
      %p226 = pneg %p56
      %p227 = pneg %p80
      %p228 = pneg %p77
      %p229 = pneg %p101
      %p230 = pneg %p98
      %p231 = pneg %p122
      %p232 = pneg %p119
      %p233 = pneg %p143
      %p234 = pneg %p140
      %p235 = pneg %p169
      %p236 = pneg %p166
      %p237 = scmp.lt.s32.totalorder %s17, 1
      %s238 = scalar_select %p237, %s17, 1
      %s239 = smul.addr %s238, 2
      %s240 = smul.addr %s239, 4
      %s241 = scalar_lea.vmem %s6, %s240
      %p242 = scmp.lt.s32.totalorder %s17, 1
      %s243 = scalar_select %p242, %s17, 1
      %s244 = smul.addr %s243, 2
      %s245 = smul.addr %s244, 8
      %s246 = scalar_lea.vmem %s1, %s245
      %p247 = scmp.lt.s32.totalorder %s17, 1
      %s248 = scalar_select %p247, %s17, 1
      %s249 = smul.addr %s248, 2
      %s250 = smul.addr %s249, 4
      %s251 = scalar_lea.vmem %s6, %s250
      %v252 = vld [vmem:[%s246] sm:$0xff]
      %v253 = vld [vmem:[%s246 + $0x8] sm:$0xff]
      %254 = vrot.lane.b32.xlu0 %v252, 17
      %v255 = vpop.permute.xlu0 %254
      %256 = vrot.lane.b32.xlu0 %v253, 17
      %v257 = vpop.permute.xlu0 %256
      %v258 = vlaneseq
      %v259 = vand.u32 %v258, 127
      %vm260 = vcmp.lt.s32.totalorder %v259, 17
      %v261 = vsel %vm260, %v255, %v257
      %v262 = vsel %vm260, %v257, %v255
      %v263 = vld [vmem:[%s0] sm:$0x3]
      %v265 = vlaneseq
      %v266 = vshrl.u32 %v265, 7
      %v267 = vsub.s32 0, %v266
      %v268 = vrot.slane %v263, %v267
      %v269 = vlaneseq
      %v270 = vshrl.u32 %v269, 7
      %v271 = vsub.s32 1, %v270
      %v272 = vrot.slane %v263, %v271
      %v275 = vmul.f32 %v262, %v268
      %v276 = vmul.f32 %v261, %v272
      %277 = vrot.lane.b32.xlu0 %v252, 16
      %v278 = vpop.permute.xlu0 %277
      %279 = vrot.lane.b32.xlu0 %v253, 16
      %v280 = vpop.permute.xlu0 %279
      %vm281 = vcmp.lt.s32.totalorder %v259, 16
      %v282 = vsel %vm281, %v278, %v280
      %v283 = vsel %vm281, %v280, %v278
      %s284 = scalar_lea.vmem %s0, 2
      %v285 = vld [vmem:[%s284] sm:$0x3]
      %v287 = vlaneseq
      %v288 = vshrl.u32 %v287, 7
      %v289 = vsub.s32 0, %v288
      %v290 = vrot.slane %v285, %v289
      %v291 = vlaneseq
      %v292 = vshrl.u32 %v291, 7
      %v293 = vsub.s32 1, %v292
      %v294 = vrot.slane %v285, %v293
      %v297 = vmul.f32 %v283, %v290
      %v298 = vmul.f32 %v282, %v294
      %299 = vrot.lane.b32.xlu0 %v252, 15
      %v300 = vpop.permute.xlu0 %299
      %301 = vrot.lane.b32.xlu0 %v253, 15
      %v302 = vpop.permute.xlu0 %301
      %vm303 = vcmp.lt.s32.totalorder %v259, 15
      %v304 = vsel %vm303, %v300, %v302
      %v305 = vsel %vm303, %v302, %v300
      %s306 = scalar_lea.vmem %s0, 4
      %v307 = vld [vmem:[%s306] sm:$0x3]
      %v309 = vlaneseq
      %v310 = vshrl.u32 %v309, 7
      %v311 = vsub.s32 0, %v310
      %v312 = vrot.slane %v307, %v311
      %v313 = vlaneseq
      %v314 = vshrl.u32 %v313, 7
      %v315 = vsub.s32 1, %v314
      %v316 = vrot.slane %v307, %v315
      %v319 = vmul.f32 %v305, %v312
      %v320 = vmul.f32 %v304, %v316
      %321 = vrot.lane.b32.xlu0 %v252, 1
      %v322 = vpop.permute.xlu0 %321
      %323 = vrot.lane.b32.xlu0 %v253, 1
      %v324 = vpop.permute.xlu0 %323
      %vm325 = vcmp.lt.s32.totalorder %v259, 1
      %v326 = vsel %vm325, %v322, %v324
      %v327 = vsel %vm325, %v324, %v322
      %s328 = scalar_lea.vmem %s0, 6
      %v329 = vld [vmem:[%s328] sm:$0x3]
      %v331 = vlaneseq
      %v332 = vshrl.u32 %v331, 7
      %v333 = vsub.s32 0, %v332
      %v334 = vrot.slane %v329, %v333
      %v335 = vlaneseq
      %v336 = vshrl.u32 %v335, 7
      %v337 = vsub.s32 1, %v336
      %v338 = vrot.slane %v329, %v337
      %v341 = vmul.f32 %v327, %v334
      %v342 = vmul.f32 %v326, %v338
      %343 = vrot.lane.b32.xlu0 %v252, 127
      %v344 = vpop.permute.xlu0 %343
      %345 = vrot.lane.b32.xlu0 %v253, 127
      %v346 = vpop.permute.xlu0 %345
      %vm347 = vcmp.lt.s32.totalorder %v259, 127
      %v348 = vsel %vm347, %v344, %v346
      %v349 = vsel %vm347, %v346, %v344
      %s350 = scalar_lea.vmem %s0, 10
      %v351 = vld [vmem:[%s350] sm:$0x3]
      %v353 = vlaneseq
      %v354 = vshrl.u32 %v353, 7
      %v355 = vsub.s32 0, %v354
      %v356 = vrot.slane %v351, %v355
      %v357 = vlaneseq
      %v358 = vshrl.u32 %v357, 7
      %v359 = vsub.s32 1, %v358
      %v360 = vrot.slane %v351, %v359
      %v363 = vmul.f32 %v348, %v356
      %v364 = vmul.f32 %v349, %v360
      %365 = vrot.lane.b32.xlu0 %v252, 113
      %v366 = vpop.permute.xlu0 %365
      %367 = vrot.lane.b32.xlu0 %v253, 113
      %v368 = vpop.permute.xlu0 %367
      %vm369 = vcmp.lt.s32.totalorder %v259, 113
      %v370 = vsel %vm369, %v366, %v368
      %v371 = vsel %vm369, %v368, %v366
      %s372 = scalar_lea.vmem %s0, 12
      %v373 = vld [vmem:[%s372] sm:$0x3]
      %v375 = vlaneseq
      %v376 = vshrl.u32 %v375, 7
      %v377 = vsub.s32 0, %v376
      %v378 = vrot.slane %v373, %v377
      %v379 = vlaneseq
      %v380 = vshrl.u32 %v379, 7
      %v381 = vsub.s32 1, %v380
      %v382 = vrot.slane %v373, %v381
      %v385 = vmul.f32 %v370, %v378
      %v386 = vmul.f32 %v371, %v382
      %387 = vrot.lane.b32.xlu0 %v252, 112
      %v388 = vpop.permute.xlu0 %387
      %389 = vrot.lane.b32.xlu0 %v253, 112
      %v390 = vpop.permute.xlu0 %389
      %vm391 = vcmp.lt.s32.totalorder %v259, 112
      %v392 = vsel %vm391, %v388, %v390
      %v393 = vsel %vm391, %v390, %v388
      %s394 = scalar_lea.vmem %s0, 14
      %v395 = vld [vmem:[%s394] sm:$0x3]
      %v397 = vlaneseq
      %v398 = vshrl.u32 %v397, 7
      %v399 = vsub.s32 0, %v398
      %v400 = vrot.slane %v395, %v399
      %v401 = vlaneseq
      %v402 = vshrl.u32 %v401, 7
      %v403 = vsub.s32 1, %v402
      %v404 = vrot.slane %v395, %v403
      %v407 = vmul.f32 %v392, %v400
      %v408 = vmul.f32 %v393, %v404
      %409 = vrot.lane.b32.xlu0 %v252, 111
      %v410 = vpop.permute.xlu0 %409
      %411 = vrot.lane.b32.xlu0 %v253, 111
      %v412 = vpop.permute.xlu0 %411
      %vm413 = vcmp.lt.s32.totalorder %v259, 111
      %v414 = vsel %vm413, %v410, %v412
      %v415 = vsel %vm413, %v412, %v410
      %s416 = scalar_lea.vmem %s0, 16
      %v417 = vld [vmem:[%s416] sm:$0x3]
      %v419 = vlaneseq
      %v420 = vshrl.u32 %v419, 7
      %v421 = vsub.s32 0, %v420
      %v422 = vrot.slane %v417, %v421
      %v423 = vlaneseq
      %v424 = vshrl.u32 %v423, 7
      %v425 = vsub.s32 1, %v424
      %v426 = vrot.slane %v417, %v425
      %v429 = vmul.f32 %v414, %v422
      %v430 = vmul.f32 %v415, %v426
      %v431 = vld [vmem:[%s2] sm:$0xff]
      %v432 = vld [vmem:[%s3] sm:$0xff]
      %434 = vset.pattern.permute.xlu0 0
      %435 = vperm.xlu0 %434, %v432
      %v436 = vpop.permute.xlu0 %435
      %vm438 = vcmask 588800
      %v440 = vsel %vm438, %v431, 0
      %442 = vmatprep.subr.mxu0 %v276
      %443 = vmatpush1.msra.mxu0 %v275
      %444 = vmatprep.subr.mxu0 %v298
      %445 = vmatpush1.msra.mxu0 %v297
      %446 = vmatprep.subr.mxu0 %v320
      %447 = vmatpush1.msra.mxu0 %v319
      %448 = vmatprep.subr.mxu0 %v342
      %449 = vmatpush1.msra.mxu0 %v341
      %450 = vmatprep.subr.mxu0 %v253
      %451 = vmatpush1.msra.mxu0 %v252
      %452 = vmatprep.subr.mxu0 %v364
      %453 = vmatpush1.msra.mxu0 %v363
      %454 = vmatprep.subr.mxu0 %v386
      %455 = vmatpush1.msra.mxu0 %v385
      %456 = vmatprep.subr.mxu0 %v408
      %457 = vmatpush1.msra.mxu0 %v407
      %458 = vmatprep.subr.mxu0 %v430
      %459 = vmatpush1.msra.mxu0 %v429
      %460 = vmatprep.subr.mxu0 0.0
      %461 = vmatpush1.msra.mxu0 0.0
      %462 = vmatprep.subr.mxu0 0.0
      %463 = vmatpush1.msra.mxu0 0.0
      %464 = vmatprep.subr.mxu0 0.0
      %465 = vmatpush1.msra.mxu0 0.0
      %466 = vmatprep.subr.mxu0 0.0
      %467 = vmatpush1.msra.mxu0 0.0
      %468 = vmatprep.subr.mxu0 0.0
      %469 = vmatpush1.msra.mxu0 0.0
      %470 = vmatprep.subr.mxu0 0.0
      %471 = vmatpush1.msra.mxu0 0.0
      %472 = vmatprep.subr.mxu0 0.0
      %473 = vmatpush1.msra.mxu0 0.0
      %474 = vmatprep.subr.mxu0 0.0
      %475 = vmatpush1.msra.mxu0 0.0
      %476 = vmatprep.subr.mxu0 0.0
      %477 = vmatpush1.msra.mxu0 0.0
      %478 = vmatprep.subr.mxu0 0.0
      %479 = vmatpush1.msra.mxu0 0.0
      %480 = vmatprep.subr.mxu0 0.0
      %481 = vmatpush1.msra.mxu0 0.0
      %482 = vmatprep.subr.mxu0 0.0
      %483 = vmatpush1.msra.mxu0 0.0
      %484 = vmatprep.subr.mxu0 0.0
      %485 = vmatpush1.msra.mxu0 0.0
      %486 = vmatprep.subr.mxu0 0.0
      %487 = vmatpush1.msra.mxu0 0.0
      %488 = vmatprep.subr.mxu0 0.0
      %489 = vmatpush1.msra.mxu0 0.0
      %490 = vmatprep.subr.mxu0 0.0
      %491 = vmatpush1.msra.mxu0 0.0
      %492 = vmatprep.subr.mxu0 0.0
      %493 = vmatpush1.msra.mxu0 0.0
      %494 = vmatprep.subr.mxu0 0.0
      %495 = vmatpush1.msra.mxu0 0.0
      %496 = vmatprep.subr.mxu0 0.0
      %497 = vmatpush1.msra.mxu0 0.0
      %498 = vmatprep.subr.mxu0 0.0
      %499 = vmatpush1.msra.mxu0 0.0
      %500 = vmatprep.subr.mxu0 0.0
      %501 = vmatpush1.msra.mxu0 0.0
      %502 = vmatprep.subr.mxu0 0.0
      %503 = vmatpush1.msra.mxu0 0.0
      %504 = vmatprep.subr.mxu0 0.0
      %505 = vmatpush1.msra.mxu0 0.0
      %506 = vmatprep.mubr.f32.mxu0 0.0
      %507 = vmatmul.mubr.f32.gmra.mrb[0].mxu0 %v440
      %v508 = vpop.f32.mrb[0].mxu0
      %v509 = vadd.f32 %v436, %v508
      %v510 = vpop.f32.mrb[0].mxu0
      %v511 = vadd.f32 %v436, %v510
      %512 = vdwg.mxu0
      %v513 = vmul.f32 %v509, 0.5
      %v514 = vmul.f32 %v511, 0.5
      %v515 = vmul.f32 %v509, 0.70710677
      %v516 = vmul.f32 %v511, 0.70710677
      %v517 = verf.f32.pop %v515
      %v518 = verf.f32.pop %v516
      %v519 = vadd.f32 %v517, 1.0
      %v520 = vadd.f32 %v518, 1.0
      %v521 = vmul.f32 %v513, %v519
      %v522 = vmul.f32 %v514, %v520
      %523 = vrot.lane.b32.xlu0 %v521, 17
      %v524 = vpop.permute.xlu0 %523
      %525 = vrot.lane.b32.xlu0 %v522, 17
      %v526 = vpop.permute.xlu0 %525
      %v527 = vsel %vm260, %v524, %v526
      %v528 = vsel %vm260, %v526, %v524
      %v529 = vmul.f32 %v528, %v268
      %v530 = vmul.f32 %v527, %v272
      %531 = vrot.lane.b32.xlu0 %v521, 16
      %v532 = vpop.permute.xlu0 %531
      %533 = vrot.lane.b32.xlu0 %v522, 16
      %v534 = vpop.permute.xlu0 %533
      %v535 = vsel %vm281, %v532, %v534
      %v536 = vsel %vm281, %v534, %v532
      %v537 = vmul.f32 %v536, %v290
      %v538 = vmul.f32 %v535, %v294
      %539 = vrot.lane.b32.xlu0 %v521, 15
      %v540 = vpop.permute.xlu0 %539
      %541 = vrot.lane.b32.xlu0 %v522, 15
      %v542 = vpop.permute.xlu0 %541
      %v543 = vsel %vm303, %v540, %v542
      %v544 = vsel %vm303, %v542, %v540
      %v545 = vmul.f32 %v544, %v312
      %v546 = vmul.f32 %v543, %v316
      %547 = vrot.lane.b32.xlu0 %v521, 1
      %v548 = vpop.permute.xlu0 %547
      %549 = vrot.lane.b32.xlu0 %v522, 1
      %v550 = vpop.permute.xlu0 %549
      %v551 = vsel %vm325, %v548, %v550
      %v552 = vsel %vm325, %v550, %v548
      %v553 = vmul.f32 %v552, %v334
      %v554 = vmul.f32 %v551, %v338
      %555 = vrot.lane.b32.xlu0 %v521, 127
      %v556 = vpop.permute.xlu0 %555
      %557 = vrot.lane.b32.xlu0 %v522, 127
      %v558 = vpop.permute.xlu0 %557
      %v559 = vsel %vm347, %v556, %v558
      %v560 = vsel %vm347, %v558, %v556
      %v561 = vmul.f32 %v559, %v356
      %v562 = vmul.f32 %v560, %v360
      %563 = vrot.lane.b32.xlu0 %v521, 113
      %v564 = vpop.permute.xlu0 %563
      %565 = vrot.lane.b32.xlu0 %v522, 113
      %v566 = vpop.permute.xlu0 %565
      %v567 = vsel %vm369, %v564, %v566
      %v568 = vsel %vm369, %v566, %v564
      %v569 = vmul.f32 %v567, %v378
      %v570 = vmul.f32 %v568, %v382
      %571 = vrot.lane.b32.xlu0 %v521, 112
      %v572 = vpop.permute.xlu0 %571
      %573 = vrot.lane.b32.xlu0 %v522, 112
      %v574 = vpop.permute.xlu0 %573
      %v575 = vsel %vm391, %v572, %v574
      %v576 = vsel %vm391, %v574, %v572
      %v577 = vmul.f32 %v575, %v400
      %v578 = vmul.f32 %v576, %v404
      %579 = vrot.lane.b32.xlu0 %v521, 111
      %v580 = vpop.permute.xlu0 %579
      %581 = vrot.lane.b32.xlu0 %v522, 111
      %v582 = vpop.permute.xlu0 %581
      %v583 = vsel %vm413, %v580, %v582
      %v584 = vsel %vm413, %v582, %v580
      %v585 = vmul.f32 %v583, %v422
      %v586 = vmul.f32 %v584, %v426
      %v587 = vld [vmem:[%s4] sm:$0xf]
      %v588 = vld [vmem:[%s5] sm:$0xf]
      %590 = vset.pattern.permute.xlu0 0
      %591 = vperm.xlu0 %590, %v588
      %v592 = vpop.permute.xlu0 %591
      %v595 = vsel %vm438, %v587, 0
      %597 = vmatprep.subr.mxu0 %v530
      %598 = vmatpush1.msra.mxu0 %v529
      %599 = vmatprep.subr.mxu0 %v538
      %600 = vmatpush1.msra.mxu0 %v537
      %601 = vmatprep.subr.mxu0 %v546
      %602 = vmatpush1.msra.mxu0 %v545
      %603 = vmatprep.subr.mxu0 %v554
      %604 = vmatpush1.msra.mxu0 %v553
      %605 = vmatprep.subr.mxu0 %v522
      %606 = vmatpush1.msra.mxu0 %v521
      %607 = vmatprep.subr.mxu0 %v562
      %608 = vmatpush1.msra.mxu0 %v561
      %609 = vmatprep.subr.mxu0 %v570
      %610 = vmatpush1.msra.mxu0 %v569
      %611 = vmatprep.subr.mxu0 %v578
      %612 = vmatpush1.msra.mxu0 %v577
      %613 = vmatprep.subr.mxu0 %v586
      %614 = vmatpush1.msra.mxu0 %v585
      %615 = vmatprep.subr.mxu0 0.0
      %616 = vmatpush1.msra.mxu0 0.0
      %617 = vmatprep.subr.mxu0 0.0
      %618 = vmatpush1.msra.mxu0 0.0
      %619 = vmatprep.subr.mxu0 0.0
      %620 = vmatpush1.msra.mxu0 0.0
      %621 = vmatprep.subr.mxu0 0.0
      %622 = vmatpush1.msra.mxu0 0.0
      %623 = vmatprep.subr.mxu0 0.0
      %624 = vmatpush1.msra.mxu0 0.0
      %625 = vmatprep.subr.mxu0 0.0
      %626 = vmatpush1.msra.mxu0 0.0
      %627 = vmatprep.subr.mxu0 0.0
      %628 = vmatpush1.msra.mxu0 0.0
      %629 = vmatprep.subr.mxu0 0.0
      %630 = vmatpush1.msra.mxu0 0.0
      %631 = vmatprep.subr.mxu0 0.0
      %632 = vmatpush1.msra.mxu0 0.0
      %633 = vmatprep.subr.mxu0 0.0
      %634 = vmatpush1.msra.mxu0 0.0
      %635 = vmatprep.subr.mxu0 0.0
      %636 = vmatpush1.msra.mxu0 0.0
      %637 = vmatprep.subr.mxu0 0.0
      %638 = vmatpush1.msra.mxu0 0.0
      %639 = vmatprep.subr.mxu0 0.0
      %640 = vmatpush1.msra.mxu0 0.0
      %641 = vmatprep.subr.mxu0 0.0
      %642 = vmatpush1.msra.mxu0 0.0
      %643 = vmatprep.subr.mxu0 0.0
      %644 = vmatpush1.msra.mxu0 0.0
      %645 = vmatprep.subr.mxu0 0.0
      %646 = vmatpush1.msra.mxu0 0.0
      %647 = vmatprep.subr.mxu0 0.0
      %648 = vmatpush1.msra.mxu0 0.0
      %649 = vmatprep.subr.mxu0 0.0
      %650 = vmatpush1.msra.mxu0 0.0
      %651 = vmatprep.subr.mxu0 0.0
      %652 = vmatpush1.msra.mxu0 0.0
      %653 = vmatprep.subr.mxu0 0.0
      %654 = vmatpush1.msra.mxu0 0.0
      %655 = vmatprep.subr.mxu0 0.0
      %656 = vmatpush1.msra.mxu0 0.0
      %657 = vmatprep.subr.mxu0 0.0
      %658 = vmatpush1.msra.mxu0 0.0
      %659 = vmatprep.subr.mxu0 0.0
      %660 = vmatpush1.msra.mxu0 0.0
      %661 = vmatprep.mubr.f32.mxu0 0.0
      %662 = vmatmul.mubr.f32.gmra.mrb[0].mxu0 %v595
      %v663 = vpop.f32.mrb[0].mxu0
      %v664 = vadd.f32 %v592, %v663
      %v665 = vpop.f32.mrb[0].mxu0
      %v666 = vadd.f32 %v592, %v665
      %667 = vdwg.mxu0
      %v668 = vmul.f32 %v664, 0.5
      %v669 = vmul.f32 %v666, 0.5
      %v670 = vmul.f32 %v664, 0.70710677
      %v671 = vmul.f32 %v666, 0.70710677
      %v672 = verf.f32.pop %v670
      %v673 = verf.f32.pop %v671
      %v674 = vadd.f32 %v672, 1.0
      %v675 = vadd.f32 %v673, 1.0
      %v676 = vmul.f32 %v668, %v674
      %v677 = vmul.f32 %v669, %v675
      %v680 = vcombine.low %v676, %v677
      %682 = vst [vmem:[%s251] sm:$0xff] %v680
      %p683 = scmp.lt.s32.totalorder %s17, 1
      %s684 = scalar_select %p683, %s17, 1
      %s685 = smul.addr %s684, 2
      %s686 = smul.addr %s685, 4
      %s687 = scalar_lea.vmem %s6, %s686
      // Predicated region
      $region45: #{mlp_block_apply.1} parent=43 // pred_check
        %p688 = pneg %p166
      $region46: #{mlp_block_apply.1} parent=43 // pred_check_branch
        %690 = sbr.rel (%p688) target = $region48
      $region47: #{mlp_block_apply.1} parent=43 // pred_region
        _
      $region48: #{mlp_block_apply.1} parent=43 // pred_fallthru
        _
    $region44: #{mlp_block_apply.1} parent=5 // pred_fallthru
      _
    %p691 = scmp.le.s32.totalorder 2, %s12
    // Predicated region
    $region49: #{mlp_block_apply.1} parent=5 // pred_check
      %p692 = pneg %p691
    $region50: #{mlp_block_apply.1} parent=5 // pred_check_branch
      %694 = sbr.rel (%p692) target = $region52
    $region51: #{mlp_block_apply.1} parent=5 // pred_region
      %s695 = ssub.s32 %s12, 2
      // Predicated region
      $region53: #{mlp_block_apply.1} parent=51 // pred_check
        %p696 = pneg %p172
      $region54: #{mlp_block_apply.1} parent=51 // pred_check_branch
        %698 = sbr.rel (%p696) target = $region56
      $region55: #{mlp_block_apply.1} parent=51 // pred_region
        %p699 = scmp.lt.s32.totalorder %s18, 1
        %s700 = scalar_select %p699, %s18, 1
        %s701 = smul.addr %s700, 2
        %s702 = smul.addr %s701, 4
        %s703 = scalar_lea.vmem %s6, %s702
      $region56: #{mlp_block_apply.1} parent=51 // pred_fallthru
        _
    $region52: #{mlp_block_apply.1} parent=5 // pred_fallthru
      _
  $region6: #{mlp_block_apply.1} parent=0 // loop_footer
    %s16 = sadd.s32 1, %s12
  $region7: #{mlp_block_apply.1} parent=0 // loop_footer_branch
    %11 = sbr.rel target = $region3
  $region8: #{mlp_block_apply.1} parent=0 // loop_exit
    _

</llo_original>
